<compile_context>
chip_gen: v5e
topology: v5e:2x2
jax: 0.10.0
libtpu: 0.0.40
codegen_flags: <defaults>
</compile_context>

<pallas_src>
import functools

import jax
import jax.numpy as jnp
import numpy as np
from jax.experimental import pallas as pl
from jax.experimental.pallas import tpu as pltpu

LN_EPS = 1e-5


def _final_expand_kernel(x_ref, w_ref, b_ref, g_ref, beta_ref, s_ref, st_ref,
                         o_ref):
    """Fused Linear(C->16C) + per-C-group LayerNorm for one row block.

    x_ref    : (TM, C)          input tokens (TM = tbh * W), native dtype
    w_ref    : (C, 16C)         full weight, VMEM-resident (constant index_map)
    b_ref    : (1, 16C)         bias (f32)
    g_ref    : (1, 16C)         LayerNorm gamma tiled 16x (f32)
    beta_ref : (1, 16C)         LayerNorm beta tiled 16x (f32)
    s_ref    : (16C, 16)        0/1 group-indicator matrix (f32)
    st_ref   : (16, 16C)        its transpose (f32)
    o_ref    : (tbh, 4, W, 4C)  output block, laid out (h, p1, w, (p2, c))
    """
    tbh, _, w_img, n4 = o_ref.shape
    n16 = w_ref.shape[-1]
    inv_c = 1.0 / (n16 // 16)

    # One big MXU matmul per row block (p1 collapsed), f32 accumulation.
    y = jnp.dot(x_ref[...], w_ref[...], preferred_element_type=jnp.float32)
    y = y + b_ref[...]

    # Per-C-group statistics via the idle MXU: segmented sums against a 0/1
    # indicator matrix instead of 16 sub-128 lane slices + concatenate.
    s = s_ref[...]
    sums = jnp.dot(y, s, preferred_element_type=jnp.float32)        # (TM, 16)
    sumsq = jnp.dot(y * y, s, preferred_element_type=jnp.float32)   # (TM, 16)
    mean = sums * inv_c
    var = sumsq * inv_c - mean * mean
    rstd = jax.lax.rsqrt(var + LN_EPS)

    # Broadcast per-group stats back to the full lane axis (again via MXU),
    # folding gamma into the scale so the affine is (y - mean)*scale + beta.
    st = st_ref[...]
    mean_f = jnp.dot(mean, st, preferred_element_type=jnp.float32)   # (TM,16C)
    scale_f = jnp.dot(rstd, st, preferred_element_type=jnp.float32) * g_ref[...]
    out = ((y - mean_f) * scale_f + beta_ref[...]).astype(o_ref.dtype)

    # Output element order is (h, p1, w, p2, c); lanes of `out` are (p1,p2,c)
    # and rows are (h, w).  Peel p1 off the lane axis with 4 static slices
    # (lane offsets are multiples of 4C, i.e. of 128 for C % 32 == 0) and
    # store each as a lane-dense (tbh, W, 4C) sub-block.
    for p1 in range(4):
        o_ref[:, p1, :, :] = (
            out[:, p1 * n4:(p1 + 1) * n4].reshape(tbh, w_img, n4))


def _vmem_limits():
    """Generation-aware VMEM budgets (v7x: 64 MiB/TC; v5e/v6e: 128 MiB)."""
    try:
        cap = int(pltpu.get_tpu_info().vmem_capacity_bytes)
    except Exception:
        cap = 128 * 1024 * 1024
    limit = min((3 * cap) // 4, 96 * 1024 * 1024)   # scoped-VMEM ceiling
    budget = (4 * limit) // 5                        # chooser headroom
    return budget, limit


def _vmem_estimate(tm, c, itemsize):
    n16 = 16 * c
    return (2 * tm * c * itemsize          # x block (double-buffered)
            + 2 * tm * n16 * itemsize      # output block (double-buffered)
            + 2 * c * n16 * itemsize       # resident weight
            + 5 * tm * n16 * 4             # f32 intermediates (y, y^2, stats, out)
            + (n16 * 128 + 16 * n16 + 3 * n16) * 8)   # small padded constants


def _choose_row_block(bh, w_img, c, itemsize, target_tokens, vmem_budget):
    """Largest tbh (image rows per grid step) such that tbh | BH, the x block
    is sublane-aligned, the working set fits the VMEM budget and the token
    count stays near the target.  Never returns an over-budget tile when a
    smaller legal one exists."""
    divisors = [t for t in range(1, bh + 1) if bh % t == 0]
    aligned = [t for t in divisors
               if (t * w_img) % 8 == 0 or t * w_img == bh * w_img]
    if not aligned:
        aligned = [bh]                      # whole-array block is always legal
    fitting = [t for t in aligned
               if _vmem_estimate(t * w_img, c, itemsize) <= vmem_budget]
    if not fitting:
        return min(aligned)                 # best effort: smallest legal tile
    capped = [t for t in fitting if t * w_img <= max(target_tokens, w_img)]
    return max(capped) if capped else min(fitting)


@functools.partial(jax.jit, static_argnames=("block_tokens",))
def final_expand(x, weight, bias, gamma, beta, *, block_tokens=2048):
    """FinalExpand forward.

    x      : (B, L, C) with L = H*H (square map)
    weight : (16C, C)   PyTorch nn.Linear layout
    bias   : (16C,)
    gamma  : (C,)       LayerNorm weight
    beta   : (C,)       LayerNorm bias
    returns: (B, 16L, C)

    Note: for bf16 inputs the Linear runs in bf16 on the MXU with f32
    accumulation (LayerNorm always in f32); this differs slightly from a pure
    f32 PyTorch nn.Linear.
    """
    B, L, C = x.shape
    H = int(round(float(np.sqrt(L))))
    W = H
    assert H * W == L, "FinalExpand assumes a square feature map (L = H*H)."
    BH = B * H
    M = BH * W
    N4 = 4 * C
    N16 = 16 * C

    # --- operand prep (tiny; production callers should pre-store the
    #     transposed weight in (C, 16C) layout to avoid the per-call repack) --
    x_flat = x.reshape(M, C)
    w_t = weight.astype(x.dtype).T                      # (C, 16C), cols=(p1,p2,c)
    b2 = bias.astype(jnp.float32).reshape(1, N16)
    g2 = jnp.tile(gamma.astype(jnp.float32), 16).reshape(1, N16)
    be2 = jnp.tile(beta.astype(jnp.float32), 16).reshape(1, N16)

    # Constant 0/1 group-indicator matrix (compile-time constant).
    grp = np.arange(N16) // C
    s_np = (grp[:, None] == np.arange(16)[None, :]).astype(np.float32)
    s_mat = jnp.asarray(s_np)                           # (16C, 16)
    st_mat = jnp.asarray(np.ascontiguousarray(s_np.T))  # (16, 16C)

    itemsize = int(np.dtype(x.dtype).itemsize)
    vmem_budget, vmem_limit = _vmem_limits()
    tbh = _choose_row_block(BH, W, C, itemsize, block_tokens, vmem_budget)
    tm = tbh * W
    grid = (BH // tbh,)

    out4 = pl.pallas_call(
        _final_expand_kernel,
        out_shape=jax.ShapeDtypeStruct((BH, 4, W, N4), x.dtype),
        grid=grid,
        in_specs=[
            pl.BlockSpec((tm, C), lambda i: (i, 0)),       # x row block
            pl.BlockSpec((C, N16), lambda i: (0, 0)),      # weight (resident)
            pl.BlockSpec((1, N16), lambda i: (0, 0)),      # bias
            pl.BlockSpec((1, N16), lambda i: (0, 0)),      # gamma (tiled)
            pl.BlockSpec((1, N16), lambda i: (0, 0)),      # beta (tiled)
            pl.BlockSpec((N16, 16), lambda i: (0, 0)),     # group indicator S
            pl.BlockSpec((16, N16), lambda i: (0, 0)),     # S.T
        ],
        # Output written directly in (b, h, p1, w, p2, c) order: the 4x4
        # rearrange is fused into the BlockSpec, no post-kernel transpose.
        out_specs=pl.BlockSpec((tbh, 4, W, N4), lambda i: (i, 0, 0, 0)),
        compiler_params=pltpu.CompilerParams(
            dimension_semantics=("parallel",),
            vmem_limit_bytes=int(vmem_limit),
        ),
    )(x_flat, w_t, b2, g2, be2, s_mat, st_mat)

    # (BH, 4, W, 4C) row-major == (b, h, p1, w, p2, c): contiguous reshape.
    return out4.reshape(B, 16 * L, C)


def _reference(x, weight, bias, gamma, beta):
    """Pure-JAX reference mirroring the PyTorch module exactly (f32)."""
    B, L, C = x.shape
    H = int(round(float(np.sqrt(L))))
    W = H
    xr = x.reshape(B, H, W, C)
    y = jnp.einsum("bhwc,oc->bhwo", xr, weight) + bias          # (B,H,W,16C)
    y = y.reshape(B, H, W, 4, 4, C)
    y = jnp.transpose(y, (0, 1, 3, 2, 4, 5)).reshape(B, 16 * L, C)
    mean = jnp.mean(y, axis=-1, keepdims=True)
    var = jnp.mean(jnp.square(y - mean), axis=-1, keepdims=True)
    yn = (y - mean) / jnp.sqrt(var + LN_EPS)
    return yn * gamma + beta


if __name__ == "__main__":
    def run_case(B, C, H, dtype, rtol, atol):
        key = jax.random.PRNGKey(0)
        kx, kw, kb, kg, kbe = jax.random.split(key, 5)
        L = H * H
        x32 = jax.random.normal(kx, (B, L, C), dtype=jnp.float32)
        weight = jax.random.normal(kw, (16 * C, C), dtype=jnp.float32) * 0.1
        bias = jax.random.normal(kb, (16 * C,), dtype=jnp.float32) * 0.1
        gamma = 1.0 + 0.1 * jax.random.normal(kg, (C,), dtype=jnp.float32)
        beta = 0.1 * jax.random.normal(kbe, (C,), dtype=jnp.float32)

        x = x32.astype(dtype)
        out = jax.block_until_ready(final_expand(x, weight, bias, gamma, beta))
        ref = jax.block_until_ready(
            _reference(x.astype(jnp.float32), weight, bias, gamma, beta))
        np.testing.assert_allclose(
            np.asarray(out.astype(jnp.float32)), np.asarray(ref),
            rtol=rtol, atol=atol)
        assert out.shape == (B, 16 * L, C)

    # Tiny shape (matches the original module test).
    run_case(B=2, C=4, H=4, dtype=jnp.float32, rtol=2e-4, atol=2e-4)
    # (8,128)-tiled path: 4C = 128-aligned lane slices, tm multiple of 8.
    run_case(B=2, C=32, H=16, dtype=jnp.float32, rtol=2e-4, atol=2e-4)
    # bf16 MXU path with Swin-T-like C=96 (4C = 384 lanes), looser tolerance.
    run_case(B=2, C=96, H=8, dtype=jnp.bfloat16, rtol=5e-2, atol=5e-2)

    print("KERNEL_OK")
</pallas_src>

<mosaic_0001>
module attributes {stable_mosaic.version = 11 : i64} {
  func.func @_final_expand_kernel(%arg0: i32, %arg1: memref<32x4xf32, #tpu.memory_space<vmem>>, %arg2: memref<4x64xf32, #tpu.memory_space<vmem>>, %arg3: memref<1x64xf32, #tpu.memory_space<vmem>>, %arg4: memref<1x64xf32, #tpu.memory_space<vmem>>, %arg5: memref<1x64xf32, #tpu.memory_space<vmem>>, %arg6: memref<64x16xf32, #tpu.memory_space<vmem>>, %arg7: memref<16x64xf32, #tpu.memory_space<vmem>>, %arg8: memref<8x4x4x16xf32, #tpu.memory_space<vmem>>) attributes {dimension_semantics = [#tpu.dimension_semantics<parallel>], iteration_bounds = array<i64: 1>, scalar_prefetch = 0 : i64, scratch_operands = 0 : i64, tpu.core_type = #tpu.core_type<tc>, window_params = [{transform_indices = @transform_0, window_bounds = array<i64: 32, 4>}, {pipeline_mode = #tpu.pipeline_mode<synchronous>, transform_indices = @transform_1, window_bounds = array<i64: 4, 64>}, {pipeline_mode = #tpu.pipeline_mode<synchronous>, transform_indices = @transform_2, window_bounds = array<i64: 1, 64>}, {pipeline_mode = #tpu.pipeline_mode<synchronous>, transform_indices = @transform_3, window_bounds = array<i64: 1, 64>}, {pipeline_mode = #tpu.pipeline_mode<synchronous>, transform_indices = @transform_4, window_bounds = array<i64: 1, 64>}, {pipeline_mode = #tpu.pipeline_mode<synchronous>, transform_indices = @transform_5, window_bounds = array<i64: 64, 16>}, {pipeline_mode = #tpu.pipeline_mode<synchronous>, transform_indices = @transform_6, window_bounds = array<i64: 16, 64>}, {transform_indices = @transform_7, window_bounds = array<i64: 8, 4, 4, 16>}]} {
    %c0 = arith.constant 0 : index
    %c0_0 = arith.constant 0 : index
    %0 = vector.load %arg1[%c0, %c0_0] : memref<32x4xf32, #tpu.memory_space<vmem>>, vector<32x4xf32>
    %c0_1 = arith.constant 0 : index
    %c0_2 = arith.constant 0 : index
    %1 = vector.load %arg2[%c0_1, %c0_2] : memref<4x64xf32, #tpu.memory_space<vmem>>, vector<4x64xf32>
    %cst = arith.constant dense<0.000000e+00> : vector<32x64xf32>
    %2 = tpu.matmul %0, %1, %cst {dimension_numbers = #tpu.dot_dimension_numbers<[1], [0], [0], [1], [0, 0, 1, 1], [], []>} : vector<32x4xf32>, vector<4x64xf32>, vector<32x64xf32> -> vector<32x64xf32>
    %c0_3 = arith.constant 0 : index
    %c0_4 = arith.constant 0 : index
    %3 = vector.load %arg3[%c0_3, %c0_4] : memref<1x64xf32, #tpu.memory_space<vmem>>, vector<1x64xf32>
    %4 = vector.broadcast %3 : vector<1x64xf32> to vector<32x64xf32>
    %5 = arith.addf %2, %4 : vector<32x64xf32>
    %c0_5 = arith.constant 0 : index
    %c0_6 = arith.constant 0 : index
    %6 = vector.load %arg6[%c0_5, %c0_6] : memref<64x16xf32, #tpu.memory_space<vmem>>, vector<64x16xf32>
    %cst_7 = arith.constant dense<0.000000e+00> : vector<32x16xf32>
    %7 = tpu.matmul %5, %6, %cst_7 {dimension_numbers = #tpu.dot_dimension_numbers<[1], [0], [0], [1], [0, 0, 1, 1], [], []>} : vector<32x64xf32>, vector<64x16xf32>, vector<32x16xf32> -> vector<32x16xf32>
    %8 = arith.mulf %5, %5 : vector<32x64xf32>
    %cst_8 = arith.constant dense<0.000000e+00> : vector<32x16xf32>
    %9 = tpu.matmul %8, %6, %cst_8 {dimension_numbers = #tpu.dot_dimension_numbers<[1], [0], [0], [1], [0, 0, 1, 1], [], []>} : vector<32x64xf32>, vector<64x16xf32>, vector<32x16xf32> -> vector<32x16xf32>
    %cst_9 = arith.constant 2.500000e-01 : f32
    %10 = vector.broadcast %cst_9 : f32 to vector<32x16xf32>
    %11 = arith.mulf %7, %10 : vector<32x16xf32>
    %cst_10 = arith.constant 2.500000e-01 : f32
    %12 = vector.broadcast %cst_10 : f32 to vector<32x16xf32>
    %13 = arith.mulf %9, %12 : vector<32x16xf32>
    %14 = arith.mulf %11, %11 : vector<32x16xf32>
    %15 = arith.subf %13, %14 : vector<32x16xf32>
    %cst_11 = arith.constant 9.99999974E-6 : f32
    %16 = vector.broadcast %cst_11 : f32 to vector<32x16xf32>
    %17 = arith.addf %15, %16 : vector<32x16xf32>
    %18 = math.rsqrt %17 : vector<32x16xf32>
    %c0_12 = arith.constant 0 : index
    %c0_13 = arith.constant 0 : index
    %19 = vector.load %arg7[%c0_12, %c0_13] : memref<16x64xf32, #tpu.memory_space<vmem>>, vector<16x64xf32>
    %cst_14 = arith.constant dense<0.000000e+00> : vector<32x64xf32>
    %20 = tpu.matmul %11, %19, %cst_14 {dimension_numbers = #tpu.dot_dimension_numbers<[1], [0], [0], [1], [0, 0, 1, 1], [], []>} : vector<32x16xf32>, vector<16x64xf32>, vector<32x64xf32> -> vector<32x64xf32>
    %cst_15 = arith.constant dense<0.000000e+00> : vector<32x64xf32>
    %21 = tpu.matmul %18, %19, %cst_15 {dimension_numbers = #tpu.dot_dimension_numbers<[1], [0], [0], [1], [0, 0, 1, 1], [], []>} : vector<32x16xf32>, vector<16x64xf32>, vector<32x64xf32> -> vector<32x64xf32>
    %c0_16 = arith.constant 0 : index
    %c0_17 = arith.constant 0 : index
    %22 = vector.load %arg4[%c0_16, %c0_17] : memref<1x64xf32, #tpu.memory_space<vmem>>, vector<1x64xf32>
    %23 = vector.broadcast %22 : vector<1x64xf32> to vector<32x64xf32>
    %24 = arith.mulf %21, %23 : vector<32x64xf32>
    %25 = arith.subf %5, %20 : vector<32x64xf32>
    %26 = arith.mulf %25, %24 : vector<32x64xf32>
    %c0_18 = arith.constant 0 : index
    %c0_19 = arith.constant 0 : index
    %27 = vector.load %arg5[%c0_18, %c0_19] : memref<1x64xf32, #tpu.memory_space<vmem>>, vector<1x64xf32>
    %28 = vector.broadcast %27 : vector<1x64xf32> to vector<32x64xf32>
    %29 = arith.addf %26, %28 : vector<32x64xf32>
    %30 = vector.extract_strided_slice %29 {offsets = [0, 0], sizes = [32, 16], strides = [1, 1]} : vector<32x64xf32> to vector<32x16xf32>
    %31 = vector.shape_cast %30 : vector<32x16xf32> to vector<8x4x16xf32>
    %c0_20 = arith.constant 0 : index
    %c0_21 = arith.constant 0 : index
    %c0_22 = arith.constant 0 : index
    %c0_23 = arith.constant 0 : index
    %32 = vector.load %arg8[%c0_20, %c0_21, %c0_22, %c0_23] : memref<8x4x4x16xf32, #tpu.memory_space<vmem>>, vector<8x1x4x16xf32>
    %33 = vector.shape_cast %32 : vector<8x1x4x16xf32> to vector<8x4x16xf32>
    %34 = vector.shape_cast %31 : vector<8x4x16xf32> to vector<8x1x4x16xf32>
    tpu.vector_store %arg8[%c0_20, %c0_21, %c0_22, %c0_23], %34 {strides = array<i32>} : memref<8x4x4x16xf32, #tpu.memory_space<vmem>>, vector<8x1x4x16xf32>,
    %35 = vector.extract_strided_slice %29 {offsets = [0, 16], sizes = [32, 16], strides = [1, 1]} : vector<32x64xf32> to vector<32x16xf32>
    %36 = vector.shape_cast %35 : vector<32x16xf32> to vector<8x4x16xf32>
    %c0_24 = arith.constant 0 : index
    %c1 = arith.constant 1 : index
    %c0_25 = arith.constant 0 : index
    %c0_26 = arith.constant 0 : index
    %37 = vector.load %arg8[%c0_24, %c1, %c0_25, %c0_26] : memref<8x4x4x16xf32, #tpu.memory_space<vmem>>, vector<8x1x4x16xf32>
    %38 = vector.shape_cast %37 : vector<8x1x4x16xf32> to vector<8x4x16xf32>
    %39 = vector.shape_cast %36 : vector<8x4x16xf32> to vector<8x1x4x16xf32>
    tpu.vector_store %arg8[%c0_24, %c1, %c0_25, %c0_26], %39 {strides = array<i32>} : memref<8x4x4x16xf32, #tpu.memory_space<vmem>>, vector<8x1x4x16xf32>,
    %40 = vector.extract_strided_slice %29 {offsets = [0, 32], sizes = [32, 16], strides = [1, 1]} : vector<32x64xf32> to vector<32x16xf32>
    %41 = vector.shape_cast %40 : vector<32x16xf32> to vector<8x4x16xf32>
    %c0_27 = arith.constant 0 : index
    %c2 = arith.constant 2 : index
    %c0_28 = arith.constant 0 : index
    %c0_29 = arith.constant 0 : index
    %42 = vector.load %arg8[%c0_27, %c2, %c0_28, %c0_29] : memref<8x4x4x16xf32, #tpu.memory_space<vmem>>, vector<8x1x4x16xf32>
    %43 = vector.shape_cast %42 : vector<8x1x4x16xf32> to vector<8x4x16xf32>
    %44 = vector.shape_cast %41 : vector<8x4x16xf32> to vector<8x1x4x16xf32>
    tpu.vector_store %arg8[%c0_27, %c2, %c0_28, %c0_29], %44 {strides = array<i32>} : memref<8x4x4x16xf32, #tpu.memory_space<vmem>>, vector<8x1x4x16xf32>,
    %45 = vector.extract_strided_slice %29 {offsets = [0, 48], sizes = [32, 16], strides = [1, 1]} : vector<32x64xf32> to vector<32x16xf32>
    %46 = vector.shape_cast %45 : vector<32x16xf32> to vector<8x4x16xf32>
    %c0_30 = arith.constant 0 : index
    %c3 = arith.constant 3 : index
    %c0_31 = arith.constant 0 : index
    %c0_32 = arith.constant 0 : index
    %47 = vector.load %arg8[%c0_30, %c3, %c0_31, %c0_32] : memref<8x4x4x16xf32, #tpu.memory_space<vmem>>, vector<8x1x4x16xf32>
    %48 = vector.shape_cast %47 : vector<8x1x4x16xf32> to vector<8x4x16xf32>
    %49 = vector.shape_cast %46 : vector<8x4x16xf32> to vector<8x1x4x16xf32>
    tpu.vector_store %arg8[%c0_30, %c3, %c0_31, %c0_32], %49 {strides = array<i32>} : memref<8x4x4x16xf32, #tpu.memory_space<vmem>>, vector<8x1x4x16xf32>,
    return
  }
  func.func @transform_0(%arg0: i32) -> (i32, i32) {
    %c0_i32 = arith.constant 0 : i32
    %c0_i32_0 = arith.constant 0 : i32
    return %arg0, %c0_i32 : i32, i32
  }
  func.func @transform_1(%arg0: i32) -> (i32, i32) {
    %c0_i32 = arith.constant 0 : i32
    %c0_i32_0 = arith.constant 0 : i32
    %c0_i32_1 = arith.constant 0 : i32
    return %c0_i32, %c0_i32_0 : i32, i32
  }
  func.func @transform_2(%arg0: i32) -> (i32, i32) {
    %c0_i32 = arith.constant 0 : i32
    %c0_i32_0 = arith.constant 0 : i32
    %c0_i32_1 = arith.constant 0 : i32
    return %c0_i32, %c0_i32_0 : i32, i32
  }
  func.func @transform_3(%arg0: i32) -> (i32, i32) {
    %c0_i32 = arith.constant 0 : i32
    %c0_i32_0 = arith.constant 0 : i32
    %c0_i32_1 = arith.constant 0 : i32
    return %c0_i32, %c0_i32_0 : i32, i32
  }
  func.func @transform_4(%arg0: i32) -> (i32, i32) {
    %c0_i32 = arith.constant 0 : i32
    %c0_i32_0 = arith.constant 0 : i32
    %c0_i32_1 = arith.constant 0 : i32
    return %c0_i32, %c0_i32_0 : i32, i32
  }
  func.func @transform_5(%arg0: i32) -> (i32, i32) {
    %c0_i32 = arith.constant 0 : i32
    %c0_i32_0 = arith.constant 0 : i32
    %c0_i32_1 = arith.constant 0 : i32
    return %c0_i32, %c0_i32_0 : i32, i32
  }
  func.func @transform_6(%arg0: i32) -> (i32, i32) {
    %c0_i32 = arith.constant 0 : i32
    %c0_i32_0 = arith.constant 0 : i32
    %c0_i32_1 = arith.constant 0 : i32
    return %c0_i32, %c0_i32_0 : i32, i32
  }
  func.func @transform_7(%arg0: i32) -> (i32, i32, i32, i32) {
    %c0_i32 = arith.constant 0 : i32
    %c0_i32_0 = arith.constant 0 : i32
    %c0_i32_1 = arith.constant 0 : i32
    %c0_i32_2 = arith.constant 0 : i32
    return %arg0, %c0_i32, %c0_i32_0, %c0_i32_1 : i32, i32, i32, i32
  }
}

</mosaic_0001>

<llo_original>
// kernel: tile.14
$region0: #{tile.14}
  %s0 = inlined_call_operand.vmem [shape: f32[16,4], index: 0, kind: input, shape index: {}]
  %s1 = inlined_call_operand.vmem [shape: f32[1,64], index: 1, kind: output, shape index: {}]
  $region1: #{tile.14} parent=0
    #allocation0 [shape = 'u8[4096]{0}', space=vmem, size = 0x1000, scoped, tag = 'scoped mem for output reshape']
    %v2 = vld [vmem:[%s0] sm:$0x1]
    %vm3 = vcmask 31744
    %4 = vst.msk [vmem:[#allocation0] sm:$0x1] %vm3, %v2
    %s5 = scalar_lea.vmem %s0, 15
    %v6 = vld [vmem:[%s5] sm:$0x1]
    %7 = vrot.lane.b32.xlu0 %v6, 60
    %v8 = vpop.permute.xlu0 %7
    %vm9 = vcmask 523744
    %10 = vst.msk [vmem:[#allocation0] sm:$0x1] %vm9, %v8
    %s11 = scalar_lea.vmem %s0, 14
    %v12 = vld [vmem:[%s11] sm:$0x1]
    %13 = vrot.lane.b32.xlu0 %v12, 56
    %v14 = vpop.permute.xlu0 %13
    %vm15 = vcmask 490944
    %16 = vst.msk [vmem:[#allocation0] sm:$0x1] %vm15, %v14
    %s17 = scalar_lea.vmem %s0, 13
    %v18 = vld [vmem:[%s17] sm:$0x1]
    %19 = vrot.lane.b32.xlu0 %v18, 52
    %v20 = vpop.permute.xlu0 %19
    %vm21 = vcmask 458144
    %22 = vst.msk [vmem:[#allocation0] sm:$0x1] %vm21, %v20
    %s23 = scalar_lea.vmem %s0, 12
    %v24 = vld [vmem:[%s23] sm:$0x1]
    %25 = vrot.lane.b32.xlu0 %v24, 48
    %v26 = vpop.permute.xlu0 %25
    %vm27 = vcmask 425344
    %28 = vst.msk [vmem:[#allocation0] sm:$0x1] %vm27, %v26
    %s29 = scalar_lea.vmem %s0, 11
    %v30 = vld [vmem:[%s29] sm:$0x1]
    %31 = vrot.lane.b32.xlu0 %v30, 44
    %v32 = vpop.permute.xlu0 %31
    %vm33 = vcmask 392544
    %34 = vst.msk [vmem:[#allocation0] sm:$0x1] %vm33, %v32
    %s35 = scalar_lea.vmem %s0, 10
    %v36 = vld [vmem:[%s35] sm:$0x1]
    %37 = vrot.lane.b32.xlu0 %v36, 40
    %v38 = vpop.permute.xlu0 %37
    %vm39 = vcmask 359744
    %40 = vst.msk [vmem:[#allocation0] sm:$0x1] %vm39, %v38
    %s41 = scalar_lea.vmem %s0, 9
    %v42 = vld [vmem:[%s41] sm:$0x1]
    %43 = vrot.lane.b32.xlu0 %v42, 36
    %v44 = vpop.permute.xlu0 %43
    %vm45 = vcmask 326944
    %46 = vst.msk [vmem:[#allocation0] sm:$0x1] %vm45, %v44
    %s47 = scalar_lea.vmem %s0, 8
    %v48 = vld [vmem:[%s47] sm:$0x1]
    %49 = vrot.lane.b32.xlu0 %v48, 32
    %v50 = vpop.permute.xlu0 %49
    %vm51 = vcmask 294144
    %52 = vst.msk [vmem:[#allocation0] sm:$0x1] %vm51, %v50
    %s53 = scalar_lea.vmem %s0, 7
    %v54 = vld [vmem:[%s53] sm:$0x1]
    %55 = vrot.lane.b32.xlu0 %v54, 28
    %v56 = vpop.permute.xlu0 %55
    %vm57 = vcmask 261344
    %58 = vst.msk [vmem:[#allocation0] sm:$0x1] %vm57, %v56
    %s59 = scalar_lea.vmem %s0, 6
    %v60 = vld [vmem:[%s59] sm:$0x1]
    %61 = vrot.lane.b32.xlu0 %v60, 24
    %v62 = vpop.permute.xlu0 %61
    %vm63 = vcmask 228544
    %64 = vst.msk [vmem:[#allocation0] sm:$0x1] %vm63, %v62
    %s65 = scalar_lea.vmem %s0, 5
    %v66 = vld [vmem:[%s65] sm:$0x1]
    %67 = vrot.lane.b32.xlu0 %v66, 20
    %v68 = vpop.permute.xlu0 %67
    %vm69 = vcmask 195744
    %70 = vst.msk [vmem:[#allocation0] sm:$0x1] %vm69, %v68
    %s71 = scalar_lea.vmem %s0, 4
    %v72 = vld [vmem:[%s71] sm:$0x1]
    %73 = vrot.lane.b32.xlu0 %v72, 16
    %v74 = vpop.permute.xlu0 %73
    %vm75 = vcmask 162944
    %76 = vst.msk [vmem:[#allocation0] sm:$0x1] %vm75, %v74
    %s77 = scalar_lea.vmem %s0, 3
    %v78 = vld [vmem:[%s77] sm:$0x1]
    %79 = vrot.lane.b32.xlu0 %v78, 12
    %v80 = vpop.permute.xlu0 %79
    %vm81 = vcmask 130144
    %82 = vst.msk [vmem:[#allocation0] sm:$0x1] %vm81, %v80
    %s83 = scalar_lea.vmem %s0, 2
    %v84 = vld [vmem:[%s83] sm:$0x1]
    %85 = vrot.lane.b32.xlu0 %v84, 8
    %v86 = vpop.permute.xlu0 %85
    %vm87 = vcmask 97344
    %88 = vst.msk [vmem:[#allocation0] sm:$0x1] %vm87, %v86
    %s89 = scalar_lea.vmem %s0, 1
    %v90 = vld [vmem:[%s89] sm:$0x1]
    %91 = vrot.lane.b32.xlu0 %v90, 4
    %v92 = vpop.permute.xlu0 %91
    %vm93 = vcmask 64544
    %94 = vst.msk [vmem:[#allocation0] sm:$0x1] %vm93, %v92
    %s96 = ssub.s32 2, 1
    %v97 = vld [vmem:[#allocation0] sm:%s96]
    %s99 = ssub.s32 2, 1
    %100 = vst [vmem:[%s1] sm:%s99] %v97

// kernel: tile.13
$region0: #{tile.13}
  #allocation0 [shape = 's32[1]{0}', space=sflag, size = 0x4, scoped, tag = 'scoped memory for tile.13']
  %s0 = inlined_call_operand.vmem [shape: f32[4], index: 0, kind: input, shape index: {}]
  %s1 = inlined_call_operand.vmem [shape: f32[16,4], index: 1, kind: output, shape index: {}]
  // Predicated region
  $region2: #{tile.13} parent=0 // pred_check
    _
  $region3: #{tile.13} parent=0 // pred_check_branch
    %3 = sbr.rel (0) target = $region5
  $region4: #{tile.13} parent=0 // pred_region
    _
  $region5: #{tile.13} parent=0 // pred_fallthru
    _
  %v4 = vld [vmem:[%s0] ss:$0 sm:$0xff]
  %5 = vst [vmem:[%s1] sm:$0xff] %v4
  %s6 = scalar_lea.vmem %s1, 8
  %7 = vst [vmem:[%s6] sm:$0xff] %v4

// kernel: final_expand.1
$region0: #{final_expand.1}
  #allocation0 [shape = 'u32[]', space=smem, size = 0x4, offset = 0x4, fixed_abs, tag = 'smem constant byte address 0x4 - core index']
  #allocation1 [shape = 'u32[72,128]{1,0:T(1,128)}', space=vmem, size = 0x9000, scoped, tag = 'internal scratch']
  %s0 = inlined_call_operand.vmem [shape: f32[32,4], index: 0, kind: input, shape index: {}]
  %s1 = inlined_call_operand.vmem [shape: f32[4,64], index: 1, kind: input, shape index: {}]
  %s2 = inlined_call_operand.vmem [shape: f32[1,64], index: 2, kind: input, shape index: {}]
  %s3 = inlined_call_operand.vmem [shape: f32[1,64], index: 3, kind: input, shape index: {}]
  %s4 = inlined_call_operand.vmem [shape: f32[1,64], index: 4, kind: input, shape index: {}]
  %s5 = inlined_call_operand.hbm [shape: f32[64,16], index: 5, kind: input, shape index: {}]
  %s6 = inlined_call_operand.vmem [shape: f32[16,64], index: 6, kind: input, shape index: {}]
  %s7 = inlined_call_operand.vmem [shape: f32[8,4,4,16], index: 7, kind: output, shape index: {}]
  %s8 = sld [smem:[#allocation0]]
  $region42: #{final_expand.1} parent=0
    _
  %s10 = ssub.s32 1, %s8
  %s11 = scalar_select 0, %s10, %s8
  $region1: #{final_expand.1} parent=0
    #allocation2 [shape = 'u8[32768]{0}', space=vmem, size = 0x8000, scoped, tag = 'input window, operand 5, single buffered']
    #allocation3 [shape = 's32[1]{0}', space=sflag, size = 0x4, scoped, tag = 'scoped memory for final_expand.1']
    %12 = vsyncpa [#allocation3], 0
    // Predicated region
    $region2: #{final_expand.1} parent=1 // pred_check
      _
    $region3: #{final_expand.1} parent=1 // pred_check_branch
      %14 = sbr.rel (0) target = $region5
    $region4: #{final_expand.1} parent=1 // pred_region
      _
    $region5: #{final_expand.1} parent=1 // pred_fallthru
      _
    // Predicated region
    $region6: #{final_expand.1} parent=1 // pred_check
      _
    $region7: #{final_expand.1} parent=1 // pred_check_branch
      %16 = sbr.rel (0) target = $region9
    $region8: #{final_expand.1} parent=1 // pred_region
      _
    $region9: #{final_expand.1} parent=1 // pred_fallthru
      _
    // Predicated region
    $region10: #{final_expand.1} parent=1 // pred_check
      _
    $region11: #{final_expand.1} parent=1 // pred_check_branch
      %18 = sbr.rel (0) target = $region13
    $region12: #{final_expand.1} parent=1 // pred_region
      _
    $region13: #{final_expand.1} parent=1 // pred_fallthru
      _
    // Predicated region
    $region14: #{final_expand.1} parent=1 // pred_check
      _
    $region15: #{final_expand.1} parent=1 // pred_check_branch
      %20 = sbr.rel (0) target = $region17
    $region16: #{final_expand.1} parent=1 // pred_region
      _
    $region17: #{final_expand.1} parent=1 // pred_fallthru
      _
    // Predicated region
    $region18: #{final_expand.1} parent=1 // pred_check
      _
    $region19: #{final_expand.1} parent=1 // pred_check_branch
      %22 = sbr.rel (0) target = $region21
    $region20: #{final_expand.1} parent=1 // pred_region
      _
    $region21: #{final_expand.1} parent=1 // pred_fallthru
      _
    // Predicated region
    $region22: #{final_expand.1} parent=1 // pred_check
      _
    $region23: #{final_expand.1} parent=1 // pred_check_branch
      %24 = sbr.rel (0) target = $region25
    $region24: #{final_expand.1} parent=1 // pred_region
      %26 = vsyncadd [#allocation3], 0
      %s27 = sshll.u32 %s5, 4
      %s28 = int_to_ptr.hbm [resolvable:$true] %s27
      %s29 = sshll.u32 [#allocation2], 4
      %s30 = int_to_ptr.vmem [resolvable:$true] %s29
      %35 = dma.hbm_to_vmem [thread:$0]  %s28, 1024, %s30, [#allocation3], 128, 128, 8
    $region25: #{final_expand.1} parent=1 // pred_fallthru
      _
    // Predicated region
    $region26: #{final_expand.1} parent=1 // pred_check
      _
    $region27: #{final_expand.1} parent=1 // pred_check_branch
      %37 = sbr.rel (0) target = $region29
    $region28: #{final_expand.1} parent=1 // pred_region
      _
    $region29: #{final_expand.1} parent=1 // pred_fallthru
      _
    // Predicated region
    $region30: #{final_expand.1} parent=1 // pred_check
      _
    $region31: #{final_expand.1} parent=1 // pred_check_branch
      %39 = sbr.rel (0) target = $region33
    $region32: #{final_expand.1} parent=1 // pred_region
      %41 = dma.done [#allocation3], 1024
    $region33: #{final_expand.1} parent=1 // pred_fallthru
      _
    %v42 = vld [vmem:[%s0] sm:$0xff]
    %v43 = vld [vmem:[%s0 + $0x8] sm:$0xff]
    %v44 = vld [vmem:[%s0 + $0x10] sm:$0xff]
    %v45 = vld [vmem:[%s0 + $0x18] sm:$0xff]
    %v46 = vld [vmem:[%s1] sm:$0xf]
    %v47 = vld [vmem:[%s2] sm:$0x1]
    %v49 = vperm.slane %v47, 0
    %vm51 = vcmask 31744
    %v53 = vsel %vm51, %v42, 0
    %v56 = vsel %vm51, %v43, 0
    %v59 = vsel %vm51, %v44, 0
    %v62 = vsel %vm51, %v45, 0
    %vm64 = vcmask 1043456
    %v66 = vsel %vm64, %v46, 0
    %68 = vmatpush.msra.mxu0 0.0
    %69 = vmatpush.msra.mxu0 0.0
    %70 = vmatpush.msra.mxu0 0.0
    %71 = vmatpush.msra.mxu0 0.0
    %72 = vmatpush.msra.mxu0 0.0
    %73 = vmatpush.msra.mxu0 0.0
    %74 = vmatpush.msra.mxu0 0.0
    %75 = vmatpush.msra.mxu0 0.0
    %76 = vmatpush.msra.mxu0 0.0
    %77 = vmatpush.msra.mxu0 0.0
    %78 = vmatpush.msra.mxu0 0.0
    %79 = vmatpush.msra.mxu0 0.0
    %80 = vmatpush.msra.mxu0 0.0
    %81 = vmatpush.msra.mxu0 0.0
    %82 = vmatpush.msra.mxu0 0.0
    %83 = vmatpush.msra.mxu0 %v66
    %84 = vmatmul.f32.gmra.mxu0 %v53
    %v85 = vpop.f32.mrf.mxu0
    %v86 = vadd.f32 %v49, %v85
    %87 = vmatmul.f32.gmra.mxu0 %v56
    %v88 = vpop.f32.mrf.mxu0
    %v89 = vadd.f32 %v49, %v88
    %90 = vmatmul.f32.gmra.mxu0 %v59
    %v91 = vpop.f32.mrf.mxu0
    %v92 = vadd.f32 %v49, %v91
    %93 = vmatmul.f32.gmra.mxu0 %v62
    %v94 = vpop.f32.mrf.mxu0
    %v95 = vadd.f32 %v49, %v94
    %96 = vdwg.mxu0
    %v97 = vld [vmem:[#allocation2] sm:$0xff]
    %v98 = vld [vmem:[#allocation2 + $0x8] sm:$0xff]
    %v99 = vld [vmem:[#allocation2 + $0x10] sm:$0xff]
    %v100 = vld [vmem:[#allocation2 + $0x18] sm:$0xff]
    %v101 = vld [vmem:[#allocation2 + $0x20] sm:$0xff]
    %v102 = vld [vmem:[#allocation2 + $0x28] sm:$0xff]
    %v103 = vld [vmem:[#allocation2 + $0x30] sm:$0xff]
    %v104 = vld [vmem:[#allocation2 + $0x38] sm:$0xff]
    %vm105 = vcmask 523264
    %v107 = vsel %vm105, %v86, 0
    %v110 = vsel %vm105, %v89, 0
    %v113 = vsel %vm105, %v92, 0
    %v116 = vsel %vm105, %v95, 0
    %118 = vmatpush.msra.mxu0 0.0
    %119 = vmatpush.msra.mxu0 0.0
    %120 = vmatpush.msra.mxu0 0.0
    %121 = vmatpush.msra.mxu0 0.0
    %122 = vmatpush.msra.mxu0 0.0
    %123 = vmatpush.msra.mxu0 0.0
    %124 = vmatpush.msra.mxu0 0.0
    %125 = vmatpush.msra.mxu0 0.0
    %126 = vmatpush.msra.mxu0 %v104
    %127 = vmatpush.msra.mxu0 %v103
    %128 = vmatpush.msra.mxu0 %v102
    %129 = vmatpush.msra.mxu0 %v101
    %130 = vmatpush.msra.mxu0 %v100
    %131 = vmatpush.msra.mxu0 %v99
    %132 = vmatpush.msra.mxu0 %v98
    %133 = vmatpush.msra.mxu0 %v97
    %134 = vmatmul.f32.gmra.mxu0 %v107
    %v135 = vpop.f32.mrf.mxu0
    %v136 = vadd.f32 0.0, %v135
    %137 = vmatmul.f32.gmra.mxu0 %v110
    %v138 = vpop.f32.mrf.mxu0
    %v139 = vadd.f32 0.0, %v138
    %140 = vmatmul.f32.gmra.mxu0 %v113
    %v141 = vpop.f32.mrf.mxu0
    %v142 = vadd.f32 0.0, %v141
    %143 = vmatmul.f32.gmra.mxu0 %v116
    %v144 = vpop.f32.mrf.mxu0
    %v145 = vadd.f32 0.0, %v144
    %146 = vdwg.mxu0
    %v147 = vmul.f32 %v86, %v86
    %v148 = vmul.f32 %v89, %v89
    %v149 = vmul.f32 %v92, %v92
    %v150 = vmul.f32 %v95, %v95
    %v152 = vsel %vm105, %v147, 0
    %v155 = vsel %vm105, %v148, 0
    %v158 = vsel %vm105, %v149, 0
    %v161 = vsel %vm105, %v150, 0
    %163 = vmatpush.msra.mxu0 0.0
    %164 = vmatpush.msra.mxu0 0.0
    %165 = vmatpush.msra.mxu0 0.0
    %166 = vmatpush.msra.mxu0 0.0
    %167 = vmatpush.msra.mxu0 0.0
    %168 = vmatpush.msra.mxu0 0.0
    %169 = vmatpush.msra.mxu0 0.0
    %170 = vmatpush.msra.mxu0 0.0
    %171 = vmatpush.msra.mxu0 %v104
    %172 = vmatpush.msra.mxu0 %v103
    %173 = vmatpush.msra.mxu0 %v102
    %174 = vmatpush.msra.mxu0 %v101
    %175 = vmatpush.msra.mxu0 %v100
    %176 = vmatpush.msra.mxu0 %v99
    %177 = vmatpush.msra.mxu0 %v98
    %178 = vmatpush.msra.mxu0 %v97
    %179 = vmatmul.f32.gmra.mxu0 %v152
    %v180 = vpop.f32.mrf.mxu0
    %v181 = vadd.f32 0.0, %v180
    %182 = vmatmul.f32.gmra.mxu0 %v155
    %v183 = vpop.f32.mrf.mxu0
    %v184 = vadd.f32 0.0, %v183
    %185 = vmatmul.f32.gmra.mxu0 %v158
    %v186 = vpop.f32.mrf.mxu0
    %v187 = vadd.f32 0.0, %v186
    %188 = vmatmul.f32.gmra.mxu0 %v161
    %v189 = vpop.f32.mrf.mxu0
    %v190 = vadd.f32 0.0, %v189
    %191 = vdwg.mxu0
    %v192 = vmul.f32 %v136, 0.25
    %v193 = vmul.f32 %v139, 0.25
    %v194 = vmul.f32 %v142, 0.25
    %v195 = vmul.f32 %v145, 0.25
    %v196 = vmul.f32 %v181, 0.25
    %v197 = vmul.f32 %v184, 0.25
    %v198 = vmul.f32 %v187, 0.25
    %v199 = vmul.f32 %v190, 0.25
    %v200 = vmul.f32 %v192, %v192
    %v201 = vmul.f32 %v193, %v193
    %v202 = vmul.f32 %v194, %v194
    %v203 = vmul.f32 %v195, %v195
    %v204 = vsub.f32 %v196, %v200
    %v205 = vsub.f32 %v197, %v201
    %v206 = vsub.f32 %v198, %v202
    %v207 = vsub.f32 %v199, %v203
    %v208 = vadd.f32 %v204, 1e-05
    %v209 = vadd.f32 %v205, 1e-05
    %v210 = vadd.f32 %v206, 1e-05
    %v211 = vadd.f32 %v207, 1e-05
    %v212 = vrsqrt.pop %v208
    %v213 = vmul.f32 %v212, %v208
    %v214 = vmul.f32 %v213, %v212
    %v215 = vmul.f32 0.5, %v214
    %v216 = vsub.f32 1.5, %v215
    %v217 = vmul.f32 %v212, %v216
    %vm218 = vweird.f32 %v208
    %vm219 = vweird.f32 %v212
    %vm220 = vmor %vm218, %vm219
    %v221 = vsel %vm220, %v212, %v217
    %v222 = vrsqrt.pop %v209
    %v223 = vmul.f32 %v222, %v209
    %v224 = vmul.f32 %v223, %v222
    %v225 = vmul.f32 0.5, %v224
    %v226 = vsub.f32 1.5, %v225
    %v227 = vmul.f32 %v222, %v226
    %vm228 = vweird.f32 %v209
    %vm229 = vweird.f32 %v222
    %vm230 = vmor %vm228, %vm229
    %v231 = vsel %vm230, %v222, %v227
    %v232 = vrsqrt.pop %v210
    %v233 = vmul.f32 %v232, %v210
    %v234 = vmul.f32 %v233, %v232
    %v235 = vmul.f32 0.5, %v234
    %v236 = vsub.f32 1.5, %v235
    %v237 = vmul.f32 %v232, %v236
    %vm238 = vweird.f32 %v210
    %vm239 = vweird.f32 %v232
    %vm240 = vmor %vm238, %vm239
    %v241 = vsel %vm240, %v232, %v237
    %v242 = vrsqrt.pop %v211
    %v243 = vmul.f32 %v242, %v211
    %v244 = vmul.f32 %v243, %v242
    %v245 = vmul.f32 0.5, %v244
    %v246 = vsub.f32 1.5, %v245
    %v247 = vmul.f32 %v242, %v246
    %vm248 = vweird.f32 %v211
    %vm249 = vweird.f32 %v242
    %vm250 = vmor %vm248, %vm249
    %v251 = vsel %vm250, %v242, %v247
    %v252 = vld [vmem:[%s6] sm:$0xff]
    %v253 = vld [vmem:[%s6 + $0x8] sm:$0xff]
    %vm254 = vcmask 130048
    %v256 = vsel %vm254, %v192, 0
    %v259 = vsel %vm254, %v193, 0
    %v262 = vsel %vm254, %v194, 0
    %v265 = vsel %vm254, %v195, 0
    %267 = vmatpush.msra.mxu0 0.0
    %268 = vmatpush.msra.mxu0 0.0
    %269 = vmatpush.msra.mxu0 0.0
    %270 = vmatpush.msra.mxu0 0.0
    %271 = vmatpush.msra.mxu0 0.0
    %272 = vmatpush.msra.mxu0 0.0
    %273 = vmatpush.msra.mxu0 0.0
    %274 = vmatpush.msra.mxu0 0.0
    %275 = vmatpush.msra.mxu0 0.0
    %276 = vmatpush.msra.mxu0 0.0
    %277 = vmatpush.msra.mxu0 0.0
    %278 = vmatpush.msra.mxu0 0.0
    %279 = vmatpush.msra.mxu0 0.0
    %280 = vmatpush.msra.mxu0 0.0
    %281 = vmatpush.msra.mxu0 %v253
    %282 = vmatpush.msra.mxu0 %v252
    %283 = vmatmul.f32.gmra.mxu0 %v256
    %v284 = vpop.f32.mrf.mxu0
    %v285 = vadd.f32 0.0, %v284
    %286 = vmatmul.f32.gmra.mxu0 %v259
    %v287 = vpop.f32.mrf.mxu0
    %v288 = vadd.f32 0.0, %v287
    %289 = vmatmul.f32.gmra.mxu0 %v262
    %v290 = vpop.f32.mrf.mxu0
    %v291 = vadd.f32 0.0, %v290
    %292 = vmatmul.f32.gmra.mxu0 %v265
    %v293 = vpop.f32.mrf.mxu0
    %v294 = vadd.f32 0.0, %v293
    %295 = vdwg.mxu0
    %v297 = vsel %vm254, %v221, 0
    %v300 = vsel %vm254, %v231, 0
    %v303 = vsel %vm254, %v241, 0
    %v306 = vsel %vm254, %v251, 0
    %308 = vmatpush.msra.mxu0 0.0
    %309 = vmatpush.msra.mxu0 0.0
    %310 = vmatpush.msra.mxu0 0.0
    %311 = vmatpush.msra.mxu0 0.0
    %312 = vmatpush.msra.mxu0 0.0
    %313 = vmatpush.msra.mxu0 0.0
    %314 = vmatpush.msra.mxu0 0.0
    %315 = vmatpush.msra.mxu0 0.0
    %316 = vmatpush.msra.mxu0 0.0
    %317 = vmatpush.msra.mxu0 0.0
    %318 = vmatpush.msra.mxu0 0.0
    %319 = vmatpush.msra.mxu0 0.0
    %320 = vmatpush.msra.mxu0 0.0
    %321 = vmatpush.msra.mxu0 0.0
    %322 = vmatpush.msra.mxu0 %v253
    %323 = vmatpush.msra.mxu0 %v252
    %324 = vmatmul.f32.gmra.mxu0 %v297
    %v325 = vpop.f32.mrf.mxu0
    %v326 = vadd.f32 0.0, %v325
    %327 = vmatmul.f32.gmra.mxu0 %v300
    %v328 = vpop.f32.mrf.mxu0
    %v329 = vadd.f32 0.0, %v328
    %330 = vmatmul.f32.gmra.mxu0 %v303
    %v331 = vpop.f32.mrf.mxu0
    %v332 = vadd.f32 0.0, %v331
    %333 = vmatmul.f32.gmra.mxu0 %v306
    %v334 = vpop.f32.mrf.mxu0
    %v335 = vadd.f32 0.0, %v334
    %336 = vdwg.mxu0
    %v337 = vld [vmem:[%s3] sm:$0x1]
    %v339 = vperm.slane %v337, 0
    %v341 = vmul.f32 %v326, %v339
    %v342 = vmul.f32 %v329, %v339
    %v343 = vmul.f32 %v332, %v339
    %v344 = vmul.f32 %v335, %v339
    %v345 = vsub.f32 %v86, %v285
    %v346 = vsub.f32 %v89, %v288
    %v347 = vsub.f32 %v92, %v291
    %v348 = vsub.f32 %v95, %v294
    %v349 = vmul.f32 %v345, %v341
    %v350 = vmul.f32 %v346, %v342
    %v351 = vmul.f32 %v347, %v343
    %v352 = vmul.f32 %v348, %v344
    %v353 = vld [vmem:[%s4] sm:$0x1]
    %v355 = vperm.slane %v353, 0
    %v357 = vadd.f32 %v349, %v355
    %v358 = vadd.f32 %v350, %v355
    %v359 = vadd.f32 %v351, %v355
    %v360 = vadd.f32 %v352, %v355
    %v365 = vrot.slane %v357, 4
    %v366 = vrot.slane %v358, 4
    %v367 = vrot.slane %v359, 4
    %v368 = vrot.slane %v360, 4
    %vm373 = vcmask 125952
    %374 = vst.msk [vmem:[%s7] sm:$0xf] %vm373, %v357
    %375 = vst.msk [vmem:[%s7 + $0x10] sm:$0xf] %vm373, %v365
    %376 = vst.msk [vmem:[%s7 + $0x20] sm:$0xf] %vm373, %v358
    %377 = vst.msk [vmem:[%s7 + $0x30] sm:$0xf] %vm373, %v366
    %378 = vst.msk [vmem:[%s7 + $0x40] sm:$0xf] %vm373, %v359
    %379 = vst.msk [vmem:[%s7 + $0x50] sm:$0xf] %vm373, %v367
    %380 = vst.msk [vmem:[%s7 + $0x60] sm:$0xf] %vm373, %v360
    %381 = vst.msk [vmem:[%s7 + $0x70] sm:$0xf] %vm373, %v368
    %382 = vst [vmem:[#allocation1] ss:$2 sm:$0xff] %v357
    %v383 = vld.sshfl [vmem:[#allocation1] sm:$0xff pattern:$0x75316420]
    %s384 = scalar_lea.vmem [#allocation1], 16
    %385 = vst [vmem:[%s384] ss:$2 sm:$0xff] %v365
    %v386 = vld.sshfl [vmem:[#allocation1 + $0x10] sm:$0xff pattern:$0x75316420]
    %s387 = scalar_lea.vmem [#allocation1], 32
    %388 = vst [vmem:[%s387] ss:$2 sm:$0xff] %v358
    %v389 = vld.sshfl [vmem:[#allocation1 + $0x20] sm:$0xff pattern:$0x75316420]
    %s390 = scalar_lea.vmem [#allocation1], 48
    %391 = vst [vmem:[%s390] ss:$2 sm:$0xff] %v366
    %v392 = vld.sshfl [vmem:[#allocation1 + $0x30] sm:$0xff pattern:$0x75316420]
    %393 = vst [vmem:[#allocation1] ss:$2 sm:$0xff] %v359
    %v394 = vld.sshfl [vmem:[#allocation1] sm:$0xff pattern:$0x75316420]
    %395 = vst [vmem:[%s384] ss:$2 sm:$0xff] %v367
    %v396 = vld.sshfl [vmem:[#allocation1 + $0x10] sm:$0xff pattern:$0x75316420]
    %397 = vst [vmem:[%s387] ss:$2 sm:$0xff] %v360
    %v398 = vld.sshfl [vmem:[#allocation1 + $0x20] sm:$0xff pattern:$0x75316420]
    %399 = vst [vmem:[%s390] ss:$2 sm:$0xff] %v368
    %v400 = vld.sshfl [vmem:[#allocation1 + $0x30] sm:$0xff pattern:$0x75316420]
    %401 = vrot.lane.b32.xlu0 %v383, 112
    %v402 = vpop.permute.xlu0 %401
    %403 = vrot.lane.b32.xlu0 %v386, 112
    %v404 = vpop.permute.xlu0 %403
    %405 = vrot.lane.b32.xlu0 %v389, 112
    %v406 = vpop.permute.xlu0 %405
    %407 = vrot.lane.b32.xlu0 %v392, 112
    %v408 = vpop.permute.xlu0 %407
    %409 = vrot.lane.b32.xlu0 %v394, 112
    %v410 = vpop.permute.xlu0 %409
    %411 = vrot.lane.b32.xlu0 %v396, 112
    %v412 = vpop.permute.xlu0 %411
    %413 = vrot.lane.b32.xlu0 %v398, 112
    %v414 = vpop.permute.xlu0 %413
    %415 = vrot.lane.b32.xlu0 %v400, 112
    %v416 = vpop.permute.xlu0 %415
    %s425 = scalar_lea.vmem %s7, 4
    %426 = vst.msk [vmem:[%s425] sm:$0xf] %vm373, %v402
    %427 = vst.msk [vmem:[%s425 + $0x10] sm:$0xf] %vm373, %v404
    %428 = vst.msk [vmem:[%s425 + $0x20] sm:$0xf] %vm373, %v406
    %429 = vst.msk [vmem:[%s425 + $0x30] sm:$0xf] %vm373, %v408
    %430 = vst.msk [vmem:[%s425 + $0x40] sm:$0xf] %vm373, %v410
    %431 = vst.msk [vmem:[%s425 + $0x50] sm:$0xf] %vm373, %v412
    %432 = vst.msk [vmem:[%s425 + $0x60] sm:$0xf] %vm373, %v414
    %433 = vst.msk [vmem:[%s425 + $0x70] sm:$0xf] %vm373, %v416
    %434 = vst [vmem:[#allocation1] ss:$2 sm:$0xff] %v357
    %v435 = vld.sshfl [vmem:[#allocation1] sm:$0xff pattern:$0x75316420]
    %s436 = scalar_lea.vmem [#allocation1], 16
    %437 = vst [vmem:[%s436] ss:$2 sm:$0xff] %v365
    %v438 = vld.sshfl [vmem:[#allocation1 + $0x10] sm:$0xff pattern:$0x75316420]
    %s439 = scalar_lea.vmem [#allocation1], 32
    %440 = vst [vmem:[%s439] ss:$2 sm:$0xff] %v358
    %v441 = vld.sshfl [vmem:[#allocation1 + $0x20] sm:$0xff pattern:$0x75316420]
    %s442 = scalar_lea.vmem [#allocation1], 48
    %443 = vst [vmem:[%s442] ss:$2 sm:$0xff] %v366
    %v444 = vld.sshfl [vmem:[#allocation1 + $0x30] sm:$0xff pattern:$0x75316420]
    %445 = vst [vmem:[#allocation1] ss:$2 sm:$0xff] %v359
    %v446 = vld.sshfl [vmem:[#allocation1] sm:$0xff pattern:$0x75316420]
    %447 = vst [vmem:[%s436] ss:$2 sm:$0xff] %v367
    %v448 = vld.sshfl [vmem:[#allocation1 + $0x10] sm:$0xff pattern:$0x75316420]
    %449 = vst [vmem:[%s439] ss:$2 sm:$0xff] %v360
    %v450 = vld.sshfl [vmem:[#allocation1 + $0x20] sm:$0xff pattern:$0x75316420]
    %451 = vst [vmem:[%s442] ss:$2 sm:$0xff] %v368
    %v452 = vld.sshfl [vmem:[#allocation1 + $0x30] sm:$0xff pattern:$0x75316420]
    %453 = vrot.lane.b32.xlu0 %v435, 96
    %v454 = vpop.permute.xlu0 %453
    %455 = vrot.lane.b32.xlu0 %v438, 96
    %v456 = vpop.permute.xlu0 %455
    %457 = vrot.lane.b32.xlu0 %v441, 96
    %v458 = vpop.permute.xlu0 %457
    %459 = vrot.lane.b32.xlu0 %v444, 96
    %v460 = vpop.permute.xlu0 %459
    %461 = vrot.lane.b32.xlu0 %v446, 96
    %v462 = vpop.permute.xlu0 %461
    %463 = vrot.lane.b32.xlu0 %v448, 96
    %v464 = vpop.permute.xlu0 %463
    %465 = vrot.lane.b32.xlu0 %v450, 96
    %v466 = vpop.permute.xlu0 %465
    %467 = vrot.lane.b32.xlu0 %v452, 96
    %v468 = vpop.permute.xlu0 %467
    %s477 = scalar_lea.vmem %s7, 8
    %478 = vst.msk [vmem:[%s477] sm:$0xf] %vm373, %v454
    %479 = vst.msk [vmem:[%s477 + $0x10] sm:$0xf] %vm373, %v456
    %480 = vst.msk [vmem:[%s477 + $0x20] sm:$0xf] %vm373, %v458
    %481 = vst.msk [vmem:[%s477 + $0x30] sm:$0xf] %vm373, %v460
    %482 = vst.msk [vmem:[%s477 + $0x40] sm:$0xf] %vm373, %v462
    %483 = vst.msk [vmem:[%s477 + $0x50] sm:$0xf] %vm373, %v464
    %484 = vst.msk [vmem:[%s477 + $0x60] sm:$0xf] %vm373, %v466
    %485 = vst.msk [vmem:[%s477 + $0x70] sm:$0xf] %vm373, %v468
    %486 = vst [vmem:[#allocation1] ss:$2 sm:$0xff] %v357
    %v487 = vld.sshfl [vmem:[#allocation1] sm:$0xff pattern:$0x75316420]
    %s488 = scalar_lea.vmem [#allocation1], 16
    %489 = vst [vmem:[%s488] ss:$2 sm:$0xff] %v365
    %v490 = vld.sshfl [vmem:[#allocation1 + $0x10] sm:$0xff pattern:$0x75316420]
    %s491 = scalar_lea.vmem [#allocation1], 32
    %492 = vst [vmem:[%s491] ss:$2 sm:$0xff] %v358
    %v493 = vld.sshfl [vmem:[#allocation1 + $0x20] sm:$0xff pattern:$0x75316420]
    %s494 = scalar_lea.vmem [#allocation1], 48
    %495 = vst [vmem:[%s494] ss:$2 sm:$0xff] %v366
    %v496 = vld.sshfl [vmem:[#allocation1 + $0x30] sm:$0xff pattern:$0x75316420]
    %497 = vst [vmem:[#allocation1] ss:$2 sm:$0xff] %v359
    %v498 = vld.sshfl [vmem:[#allocation1] sm:$0xff pattern:$0x75316420]
    %499 = vst [vmem:[%s488] ss:$2 sm:$0xff] %v367
    %v500 = vld.sshfl [vmem:[#allocation1 + $0x10] sm:$0xff pattern:$0x75316420]
    %501 = vst [vmem:[%s491] ss:$2 sm:$0xff] %v360
    %v502 = vld.sshfl [vmem:[#allocation1 + $0x20] sm:$0xff pattern:$0x75316420]
    %503 = vst [vmem:[%s494] ss:$2 sm:$0xff] %v368
    %v504 = vld.sshfl [vmem:[#allocation1 + $0x30] sm:$0xff pattern:$0x75316420]
    %505 = vrot.lane.b32.xlu0 %v487, 80
    %v506 = vpop.permute.xlu0 %505
    %507 = vrot.lane.b32.xlu0 %v490, 80
    %v508 = vpop.permute.xlu0 %507
    %509 = vrot.lane.b32.xlu0 %v493, 80
    %v510 = vpop.permute.xlu0 %509
    %511 = vrot.lane.b32.xlu0 %v496, 80
    %v512 = vpop.permute.xlu0 %511
    %513 = vrot.lane.b32.xlu0 %v498, 80
    %v514 = vpop.permute.xlu0 %513
    %515 = vrot.lane.b32.xlu0 %v500, 80
    %v516 = vpop.permute.xlu0 %515
    %517 = vrot.lane.b32.xlu0 %v502, 80
    %v518 = vpop.permute.xlu0 %517
    %519 = vrot.lane.b32.xlu0 %v504, 80
    %v520 = vpop.permute.xlu0 %519
    %s529 = scalar_lea.vmem %s7, 12
    %530 = vst.msk [vmem:[%s529] sm:$0xf] %vm373, %v506
    %531 = vst.msk [vmem:[%s529 + $0x10] sm:$0xf] %vm373, %v508
    %532 = vst.msk [vmem:[%s529 + $0x20] sm:$0xf] %vm373, %v510
    %533 = vst.msk [vmem:[%s529 + $0x30] sm:$0xf] %vm373, %v512
    %534 = vst.msk [vmem:[%s529 + $0x40] sm:$0xf] %vm373, %v514
    %535 = vst.msk [vmem:[%s529 + $0x50] sm:$0xf] %vm373, %v516
    %536 = vst.msk [vmem:[%s529 + $0x60] sm:$0xf] %vm373, %v518
    %537 = vst.msk [vmem:[%s529 + $0x70] sm:$0xf] %vm373, %v520
    // Predicated region
    $region34: #{final_expand.1} parent=1 // pred_check
      _
    $region35: #{final_expand.1} parent=1 // pred_check_branch
      %539 = sbr.rel (0) target = $region37
    $region36: #{final_expand.1} parent=1 // pred_region
      _
    $region37: #{final_expand.1} parent=1 // pred_fallthru
      _
    // Predicated region
    $region38: #{final_expand.1} parent=1 // pred_check
      _
    $region39: #{final_expand.1} parent=1 // pred_check_branch
      %541 = sbr.rel (0) target = $region41
    $region40: #{final_expand.1} parent=1 // pred_region
      _
    $region41: #{final_expand.1} parent=1 // pred_fallthru
      _
    %542 = vsyncpa [#allocation3], 1

</llo_original>
